<compile_context>
chip_gen: v5e
topology: v5e:2x2
jax: 0.10.0
libtpu: 0.0.40
codegen_flags: <defaults>
</compile_context>

<pallas_src>
import functools

import jax
import jax.numpy as jnp
from jax.experimental import pallas as pl
from jax.experimental.pallas import tpu as pltpu

_LANE = 128
_SUBLANE = 8
_BLOCK_BYTES = 6 * 1024 * 1024         # nominal logits bytes per pipelined block
_SINGLE_BLOCK_MAX_BYTES = 512 * 1024   # below this: one resident block, no grid
_VMEM_LIMIT = 32 * 1024 * 1024


# ---------------------------------------------------------------------------
# Small-input path: whole problem is one resident (C, N) block, scalar to SMEM.
# ---------------------------------------------------------------------------
def _ce_single_block_kernel(logits_ref, labels_ref, loss_ref, *, n, c):
    # logits_ref: (C, N) VMEM; labels_ref: (1, N) i32 VMEM; loss_ref: (1,1) f32 SMEM
    x = logits_ref[...].astype(jnp.float32)
    lbl = labels_ref[...]
    m = jnp.max(x, axis=0, keepdims=True)                                 # (1, N)
    lse = m + jnp.log(jnp.sum(jnp.exp(x - m), axis=0, keepdims=True))     # (1, N)
    cls = jax.lax.broadcasted_iota(jnp.int32, (c, 1), 0)                  # column iota
    tgt = jnp.sum(jnp.where(cls == lbl, x, 0.0), axis=0, keepdims=True)   # logits[lbl]
    loss_ref[0, 0] = jnp.sum(lse - tgt) * (1.0 / n)


# ---------------------------------------------------------------------------
# Large-input path: grid over the batch, (C, 8, TW) blocks, per-block partials.
# ---------------------------------------------------------------------------
def _ce_tiled_kernel(logits_ref, labels_ref, part_ref, *, c, n, w, tw, ragged):
    # logits_ref: (C, 8, TW) VMEM; labels_ref: (8, TW) i32 VMEM;
    # part_ref:   (1, 1, 128) f32 VMEM (this block's partial sum, lane-broadcast).
    i = pl.program_id(0)
    lbl = labels_ref[...]

    # Running max over classes (classes live on the leading, untiled axis,
    # so this is pure elementwise VPU work on dense (8, TW) vregs).
    m = logits_ref[0].astype(jnp.float32)
    for k in range(1, c):
        m = jnp.maximum(m, logits_ref[k].astype(jnp.float32))

    # One unrolled pass over classes: softmax denominator + target-logit gather.
    d = jnp.zeros_like(m)
    tgt = jnp.zeros_like(m)
    for k in range(c):
        xk = logits_ref[k].astype(jnp.float32)
        d = d + jnp.exp(xk - m)
        tgt = tgt + jnp.where(lbl == k, xk, 0.0)

    per = m + jnp.log(d) - tgt                         # per-sample loss, (8, TW)

    if ragged:
        # Mask (a) Pallas padding columns of the ragged last block and
        # (b) wrapper batch-padding entries.  Select (not multiply) so that
        # inf/NaN from garbage logits cannot leak into the sum.
        row = jax.lax.broadcasted_iota(jnp.int32, per.shape, 0)
        col = jax.lax.broadcasted_iota(jnp.int32, per.shape, 1) + i * tw
        per = jnp.where((col < w) & (row * w + col < n), per, 0.0)

    part_ref[...] = jnp.full(part_ref.shape, jnp.sum(per), dtype=jnp.float32)


# ---------------------------------------------------------------------------
# Wrapper
# ---------------------------------------------------------------------------
def mnist_loss(logits, labels, *, transposed=False,
               block_bytes=_BLOCK_BYTES,
               single_block_max_bytes=_SINGLE_BLOCK_MAX_BYTES):
    """Cross-entropy loss matching nn.CrossEntropyLoss()(logits, labels).

    logits: (N, C) float array (f32 or bf16); pass transposed=True if the
            producer already emits (C, N) (saves one HBM pass over logits).
    labels: (N,) integer class indices in [0, C).
    Returns a float32 scalar (mean reduction).
    """
    if transposed:
        c, n = logits.shape
        logits_cn = logits
    else:
        n, c = logits.shape
        # TODO(synk): remove by fixing producer layout / fusing (see header).
        logits_cn = logits.T                                   # (C, N)
    labels = labels.astype(jnp.int32)
    itemsize = logits.dtype.itemsize
    nominal_bytes = n * c * itemsize

    if nominal_bytes <= single_block_max_bytes:
        out = pl.pallas_call(
            functools.partial(_ce_single_block_kernel, n=n, c=c),
            out_shape=jax.ShapeDtypeStruct((1, 1), jnp.float32),
            in_specs=[
                pl.BlockSpec(memory_space=pltpu.MemorySpace.VMEM),
                pl.BlockSpec(memory_space=pltpu.MemorySpace.VMEM),
            ],
            out_specs=pl.BlockSpec(memory_space=pltpu.MemorySpace.SMEM),
            compiler_params=pltpu.CompilerParams(vmem_limit_bytes=_VMEM_LIMIT),
        )(logits_cn, labels.reshape(1, n))
        return out[0, 0]

    # ---- Tiled, double-buffered, megacore-parallel path ----
    # Pack the batch across 8 sublanes x lanes: (C, N) -> (C, 8, N/8).
    n_pad = -(-n // _SUBLANE) * _SUBLANE
    if n_pad != n:
        logits_cn = jnp.pad(logits_cn, ((0, 0), (0, n_pad - n)))
        labels = jnp.pad(labels, (0, n_pad - n))
    w = n_pad // _SUBLANE
    logits_v = logits_cn.reshape(c, _SUBLANE, w)   # free view of the (C, N) buffer
    labels_v = labels.reshape(_SUBLANE, w)

    target_tw = max(_LANE, (block_bytes // (c * _SUBLANE * itemsize)) // _LANE * _LANE)
    tw = w if w <= target_tw else target_tw
    g = int(pl.cdiv(w, tw))
    ragged = (w % tw != 0) or (n != n_pad)

    cost = pl.CostEstimate(
        flops=int(8 * n * c),
        transcendentals=int(n * (c + 1)),
        bytes_accessed=int(n * c * itemsize + n * 4 + g * 512),
    )

    partials = pl.pallas_call(
        functools.partial(_ce_tiled_kernel, c=c, n=n, w=w, tw=tw, ragged=ragged),
        out_shape=jax.ShapeDtypeStruct((g, 1, _LANE), jnp.float32),
        grid=(g,),
        in_specs=[
            pl.BlockSpec((c, _SUBLANE, tw), lambda i: (0, 0, i)),
            pl.BlockSpec((_SUBLANE, tw), lambda i: (0, i)),
        ],
        out_specs=pl.BlockSpec((1, 1, _LANE), lambda i: (i, 0, 0)),
        compiler_params=pltpu.CompilerParams(
            dimension_semantics=("parallel",),
            vmem_limit_bytes=_VMEM_LIMIT),
        cost_estimate=cost,
    )(logits_v, labels_v)

    return jnp.sum(partials[:, 0, 0]) * (1.0 / n)


# ---------------------------------------------------------------------------
if __name__ == "__main__":
    key = jax.random.PRNGKey(0)
    k1, k2, k3, k4, k5, k6 = jax.random.split(key, 6)

    def ref_ce(logits, labels):
        x = logits.astype(jnp.float32)
        lse = jax.nn.logsumexp(x, axis=-1)
        tgt = jnp.take_along_axis(x, labels[:, None].astype(jnp.int32), axis=-1)[:, 0]
        return jnp.mean(lse - tgt)

    C = 10

    # 1) MNIST-sized batch -> single resident block path.
    n1 = 8
    logits1 = jax.random.normal(k1, (n1, C), dtype=jnp.float32)
    labels1 = jax.random.randint(k2, (n1,), 0, C, dtype=jnp.int32)
    out1 = mnist_loss(logits1, labels1)
    jax.block_until_ready(out1)
    assert jnp.allclose(out1, ref_ce(logits1, labels1), atol=1e-4, rtol=1e-4), (
        out1, ref_ce(logits1, labels1))

    # 2) Tiled / megacore-parallel path (forced small blocks), n % 8 == 0.
    n2 = 2048
    logits2 = jax.random.normal(k3, (n2, C), dtype=jnp.float32)
    labels2 = jax.random.randint(k4, (n2,), 0, C, dtype=jnp.int32)
    out2 = mnist_loss(logits2, labels2, block_bytes=64 * 1024,
                      single_block_max_bytes=0)
    jax.block_until_ready(out2)
    assert jnp.allclose(out2, ref_ce(logits2, labels2), atol=1e-4, rtol=1e-4), (
        out2, ref_ce(logits2, labels2))

    # 3) Tiled path with ragged last block and batch not divisible by 8.
    n3 = 2500
    logits3 = jax.random.normal(k5, (n3, C), dtype=jnp.float32)
    labels3 = jax.random.randint(k6, (n3,), 0, C, dtype=jnp.int32)
    out3 = mnist_loss(logits3, labels3, block_bytes=64 * 1024,
                      single_block_max_bytes=0)
    jax.block_until_ready(out3)
    assert jnp.allclose(out3, ref_ce(logits3, labels3), atol=1e-4, rtol=1e-4), (
        out3, ref_ce(logits3, labels3))

    print("KERNEL_OK")
</pallas_src>

<mosaic_0001>
module attributes {stable_mosaic.version = 11 : i64} {
  func.func @_ce_single_block_kernel(%arg0: memref<10x8xf32, #tpu.memory_space<vmem>>, %arg1: memref<1x8xi32, #tpu.memory_space<vmem>>, %arg2: memref<1x1xf32, #tpu.memory_space<smem>>) attributes {dimension_semantics = [], scalar_prefetch = 0 : i64, scratch_operands = 0 : i64, tpu.core_type = #tpu.core_type<tc>} {
    %c0 = arith.constant 0 : index
    %c0_0 = arith.constant 0 : index
    %0 = vector.load %arg0[%c0, %c0_0] : memref<10x8xf32, #tpu.memory_space<vmem>>, vector<10x8xf32>
    %c0_1 = arith.constant 0 : index
    %c0_2 = arith.constant 0 : index
    %1 = vector.load %arg1[%c0_1, %c0_2] : memref<1x8xi32, #tpu.memory_space<vmem>>, vector<1x8xi32>
    %cst = arith.constant dense<0xFF800000> : vector<8xf32>
    %2 = vector.multi_reduction <maximumf>, %0, %cst [0] : vector<10x8xf32> to vector<8xf32>
    %3 = vector.shape_cast %2 : vector<8xf32> to vector<1x8xf32>
    %4 = vector.broadcast %3 : vector<1x8xf32> to vector<10x8xf32>
    %5 = arith.subf %0, %4 : vector<10x8xf32>
    %6 = math.exp %5 : vector<10x8xf32>
    %cst_3 = arith.constant dense<0.000000e+00> : vector<8xf32>
    %7 = vector.multi_reduction <add>, %6, %cst_3 [0] : vector<10x8xf32> to vector<8xf32>
    %8 = vector.shape_cast %7 : vector<8xf32> to vector<1x8xf32>
    %9 = math.log %8 : vector<1x8xf32>
    %10 = arith.addf %3, %9 : vector<1x8xf32>
    %11 = tpu.iota {dimensions = array<i32: 0>} : vector<10x1xi32>
    %12 = vector.broadcast %11 : vector<10x1xi32> to vector<10x8xi32>
    %13 = vector.broadcast %1 : vector<1x8xi32> to vector<10x8xi32>
    %14 = arith.cmpi eq, %12, %13 : vector<10x8xi32>
    %cst_4 = arith.constant 0.000000e+00 : f32
    %15 = vector.broadcast %cst_4 : f32 to vector<10x8xf32>
    %16 = arith.select %14, %0, %15 : vector<10x8xi1>, vector<10x8xf32>
    %cst_5 = arith.constant dense<0.000000e+00> : vector<8xf32>
    %17 = vector.multi_reduction <add>, %16, %cst_5 [0] : vector<10x8xf32> to vector<8xf32>
    %18 = vector.shape_cast %17 : vector<8xf32> to vector<1x8xf32>
    %19 = arith.subf %10, %18 : vector<1x8xf32>
    %20 = vector.shape_cast %19 : vector<1x8xf32> to vector<1x1x8xf32>
    %cst_6 = arith.constant dense<0.000000e+00> : vector<1xf32>
    %21 = vector.multi_reduction <add>, %20, %cst_6 [1, 2] : vector<1x1x8xf32> to vector<1xf32>
    %22 = vector.shape_cast %21 : vector<1xf32> to vector<1x1x1xf32>
    %23 = vector.extract %22[0, 0, 0] : f32 from vector<1x1x1xf32>
    %cst_7 = arith.constant 1.250000e-01 : f32
    %24 = arith.mulf %23, %cst_7 : f32
    %c0_8 = arith.constant 0 : index
    %c0_9 = arith.constant 0 : index
    %25 = memref.load %arg2[%c0_8, %c0_9] : memref<1x1xf32, #tpu.memory_space<smem>>
    memref.store %24, %arg2[%c0_8, %c0_9] : memref<1x1xf32, #tpu.memory_space<smem>>
    return
  }
}

</mosaic_0001>

<llo_original>
// kernel: tpu_custom_call.1
$region0: #{tpu_custom_call.1}
  #allocation0 [shape = 'u32[]', space=smem, size = 0x4, offset = 0x4, fixed_abs, tag = 'smem constant byte address 0x4 - core index']
  #allocation1 [shape = 'u32[72,128]{1,0:T(1,128)}', space=vmem, size = 0x9000, scoped, tag = 'internal scratch']
  %s0 = inlined_call_operand.vmem [shape: f32[10,8], index: 0, kind: input, shape index: {}]
  %s1 = inlined_call_operand.vmem [shape: s32[1,8], index: 1, kind: input, shape index: {}]
  %s2 = inlined_call_operand.hbm [shape: f32[1,1], index: 2, kind: output, shape index: {}]
  %s3 = sld [smem:[#allocation0]]
  $region18: #{tpu_custom_call.1} parent=0
    _
  %s5 = ssub.s32 1, %s3
  %s6 = scalar_select 0, %s5, %s3
  $region1: #{tpu_custom_call.1} parent=0
    #allocation2 [shape = 'u8[512]{0}', space=smem, size = 0x200, scoped, tag = 'output window, operand 0, single buffered']
    #allocation3 [shape = 's32[1]{0}', space=sflag, size = 0x4, scoped, tag = 'scoped memory for tpu_custom_call.1']
    %7 = vsyncpa [#allocation3], 0
    // Predicated region
    $region2: #{tpu_custom_call.1} parent=1 // pred_check
      _
    $region3: #{tpu_custom_call.1} parent=1 // pred_check_branch
      %9 = sbr.rel (0) target = $region5
    $region4: #{tpu_custom_call.1} parent=1 // pred_region
      _
    $region5: #{tpu_custom_call.1} parent=1 // pred_fallthru
      _
    // Predicated region
    $region6: #{tpu_custom_call.1} parent=1 // pred_check
      _
    $region7: #{tpu_custom_call.1} parent=1 // pred_check_branch
      %11 = sbr.rel (0) target = $region9
    $region8: #{tpu_custom_call.1} parent=1 // pred_region
      _
    $region9: #{tpu_custom_call.1} parent=1 // pred_fallthru
      _
    %v12 = vld [vmem:[%s0] sm:$0xff]
    %v13 = vld [vmem:[%s0 + $0x8] sm:$0x3]
    %v14 = vld [vmem:[%s1] sm:$0x1]
    %vm15 = vcmask 64512
    %v16 = vsel %vm15, %v12, -inf
    %vm17 = vcmask 58368
    %v18 = vsel %vm17, %v13, -inf
    %v19 = vmax.f32 %v16, %v18
    %v20 = vrot.slane %v19, 4
    %v21 = vmax.f32 %v19, %v20
    %v22 = vrot.slane %v21, 2
    %v23 = vmax.f32 %v21, %v22
    %v24 = vrot.slane %v23, 1
    %v25 = vmax.f32 %v23, %v24
    %v26 = vsub.f32 %v12, %v25
    %v27 = vsub.f32 %v13, %v25
    %v28 = vmul.f32 %v26, 1.442695
    %v29 = vpow.pop %v28
    %v30 = vmul.f32 %v27, 1.442695
    %v31 = vpow.pop %v30
    %v32 = vsel %vm15, %v29, 0.0
    %v33 = vsel %vm17, %v31, 0.0
    %v34 = vadd.f32 %v32, %v33
    %v35 = vrot.slane %v34, 4
    %v36 = vadd.f32 %v34, %v35
    %v37 = vrot.slane %v36, 2
    %v38 = vadd.f32 %v36, %v37
    %v39 = vrot.slane %v38, 1
    %v40 = vadd.f32 %v38, %v39
    %v41 = vlog2.pop %v40
    %v42 = vmul.f32 %v41, 0.6931472
    %v43 = vadd.f32 %v25, %v42
    %v44 = vlaneseq
    %v45 = vshrl.u32 %v44, 7
    %v46 = vadd.s32 %v45, 8
    %v47 = vperm.slane %v14, 0
    %vm48 = vcmp.eq.s32.totalorder %v45, %v47
    %vm49 = vcmp.eq.s32.totalorder %v46, %v47
    %v50 = vsel %vm48, %v12, 0.0
    %v51 = vsel %vm49, %v13, 0.0
    %v52 = vsel %vm15, %v50, 0.0
    %v53 = vsel %vm17, %v51, 0.0
    %v54 = vadd.f32 %v52, %v53
    %v55 = vrot.slane %v54, 4
    %v56 = vadd.f32 %v54, %v55
    %v57 = vrot.slane %v56, 2
    %v58 = vadd.f32 %v56, %v57
    %v59 = vrot.slane %v58, 1
    %v60 = vadd.f32 %v58, %v59
    %v61 = vsub.f32 %v43, %v60
    %vm62 = vcmask 57344
    %v63 = vsel %vm62, %v61, 0.0
    %64 = vadd.xlane.f32.xlu0 %v63
    %v65 = vpop.xlane.xlu0 %64
    %v66 = vrot.slane %v65, 4
    %v67 = vadd.f32 %v65, %v66
    %v68 = vrot.slane %v67, 2
    %v69 = vadd.f32 %v67, %v68
    %v70 = vrot.slane %v69, 1
    %v71 = vadd.f32 %v69, %v70
    %s72 = vtos %v71
    %s73 = smul.f32 %s72, 0.125
    %s74 = scalar_lea.smem [#allocation2], 0
    %75 = sst [smem:[%s74]] %s73
    // Predicated region
    $region10: #{tpu_custom_call.1} parent=1 // pred_check
      _
    $region11: #{tpu_custom_call.1} parent=1 // pred_check_branch
      %77 = sbr.rel (0) target = $region13
    $region12: #{tpu_custom_call.1} parent=1 // pred_region
      %79 = vsyncadd [#allocation3], 0
      %s81 = sshll.u32 %s2, 4
      %s82 = int_to_ptr.hbm [resolvable:$true] %s81
      %84 = dma.smem_to_hbm [#allocation2], 16, %s82, [#allocation3]
    $region13: #{tpu_custom_call.1} parent=1 // pred_fallthru
      _
    // Predicated region
    $region14: #{tpu_custom_call.1} parent=1 // pred_check
      _
    $region15: #{tpu_custom_call.1} parent=1 // pred_check_branch
      %86 = sbr.rel (0) target = $region17
    $region16: #{tpu_custom_call.1} parent=1 // pred_region
      %88 = dma.done [#allocation3], 16
    $region17: #{tpu_custom_call.1} parent=1 // pred_fallthru
      _
    %89 = sfence
    %90 = vsyncpa [#allocation3], 1

</llo_original>
